<compile_context>
chip_gen: v7x
topology: tpu7x:2x2x1
jax: 0.10.0
libtpu: 0.0.40
codegen_flags: <defaults>
</compile_context>

<pallas_src>
import jax
import jax.numpy as jnp
from jax.experimental import pallas as pl
from jax.experimental.pallas import tpu as pltpu


def _round_up(a, m):
    return ((a + m - 1) // m) * m


def _make_tv_kernel(*, n, h, w, hw, g, sub_g, cps):
    """Build the TV kernel for (g, hw) lane-dense blocks of slabs."""
    n_inner = g // sub_g

    def _roll_lanes(v, shift):
        # Static lane rotation (XLU slot, overlaps with VALU); 0 is a no-op.
        shift = shift % hw
        if shift == 0:
            return v
        return pltpu.roll(v, shift, axis=1)

    def kernel(x_ref, ids_ref, out_h_ref, out_w_ref):
        p = pl.program_id(0)   # megacore shard ("parallel")
        i = pl.program_id(1)   # chunk within shard ("arbitrary", sequential)

        @pl.when(i == 0)
        def _init():
            out_h_ref[...] = jnp.zeros_like(out_h_ref)
            out_w_ref[...] = jnp.zeros_like(out_w_ref)

        # First global slab row of this *logical* chunk.  Phantom chunks from
        # the megacore round-up start at >= n and are fully masked below.
        block_row0 = (p * cps + i) * g

        # ---- loop-invariant neighbour masks (hoisted, ~1 KiB of i32) --------
        lane = ids_ref[0:1, :]          # (1, hw): flattened index k = y*w + x
        rowk = ids_ref[1:2, :]          # (1, hw): y = k // w (host-computed)
        nbr_w = _roll_lanes(lane, hw - 1)      # index the roll brings to slot k
        nbrrow_w = _roll_lanes(rowk, hw - 1)
        nbr_h = _roll_lanes(lane, hw - w)
        # A slot contributes iff its pair is a true horizontal / vertical
        # neighbour pair; built from the rolled indices so the result is
        # independent of the rotate direction convention.
        mask_w = (jnp.abs(nbr_w - lane) == 1) & (nbrrow_w == rowk)
        mask_h = jnp.abs(nbr_h - lane) == w
        row_in_sub = jax.lax.broadcasted_iota(jnp.int32, (sub_g, hw), 0)

        def body(j, carry):
            acc_h, acc_w = carry
            r0 = pl.multiple_of(j * sub_g, sub_g)
            xs = x_ref[pl.ds(r0, sub_g), :].astype(jnp.float32)   # (sub_g, hw)
            x_w = _roll_lanes(xs, hw - 1)   # neighbour along W (same slab row)
            x_h = _roll_lanes(xs, hw - w)   # neighbour along H (same slab row)
            # Rows past n hold undefined data (partial tail block / phantom
            # chunk) -> mask them out before they touch the sums.
            valid = (block_row0 + j * sub_g + row_in_sub) < n
            dw = jnp.where(valid & mask_w, x_w - xs, 0.0)
            dh = jnp.where(valid & mask_h, x_h - xs, 0.0)
            acc_w = acc_w + jnp.sum(dw * dw, axis=0, keepdims=True)  # (1, hw)
            acc_h = acc_h + jnp.sum(dh * dh, axis=0, keepdims=True)  # (1, hw)
            return acc_h, acc_w

        zero = jnp.zeros((1, hw), jnp.float32)
        acc_h, acc_w = jax.lax.fori_loop(0, n_inner, body, (zero, zero))
        # Tiny (1, hw) read-modify-write per grid step: the outputs double as
        # the per-shard accumulators (no block-sized accumulator traffic).
        out_h_ref[0] += acc_h
        out_w_ref[0] += acc_w

    return kernel


def tv_loss(x, tv_loss_weight=1.0, *, target_block_bytes=4 << 20,
            compute_rows=256, num_shards=2):
    """Pallas equivalent of TVLoss.forward for NCHW input x."""
    b, c, h, w = x.shape
    n = b * c
    hw = h * w

    # Lane-dense layout: one slab per row of length H*W (free contiguous reshape).
    xr = x.reshape(n, hw)
    itemsize = xr.dtype.itemsize

    # ---- block sizing from the *padded* VMEM layout ---------------------------
    sub = max(8, 8 * (4 // max(itemsize, 1)))   # sublane multiple (f32:8, bf16:16)
    hw_pad = _round_up(hw, 128)
    row_bytes = hw_pad * itemsize
    g_budget = max(sub, (int(target_block_bytes) // row_bytes) // sub * sub)
    if n < sub:
        g = n                                    # block == full dim for tiny inputs
    else:
        g = min(g_budget, _round_up(n, sub))
    # Inner compute sub-chunk bounds the f32 temporaries (~6 live (sub_g, hw)
    # arrays) independently of the DMA block size.
    sub_g = min(g, max(sub, (int(compute_rows) // sub) * sub))
    g = (g // sub_g) * sub_g
    num_chunks = pl.cdiv(n, g)

    # Megacore: leading "parallel" axis; each shard owns its own output rows
    # (~2x on v7x; a harmless sequential split on 1-TC chips).
    p_shards = max(1, min(int(num_shards), num_chunks))
    cps = pl.cdiv(num_chunks, p_shards)          # chunks per shard
    last_chunk = num_chunks - 1

    # Host-precomputed lane bookkeeping (avoids vector int div/mod in-kernel).
    k_ids = jnp.arange(hw, dtype=jnp.int32)
    ids = jnp.stack([k_ids, k_ids // w]).astype(jnp.int32)   # (2, hw)

    kernel = _make_tv_kernel(n=n, h=h, w=w, hw=hw, g=g, sub_g=sub_g, cps=cps)

    x_spec = pl.BlockSpec(
        (g, hw), lambda p, i: (jnp.minimum(p * cps + i, last_chunk), 0))
    ids_spec = pl.BlockSpec((2, hw), lambda p, i: (0, 0))
    out_spec = pl.BlockSpec((1, 1, hw), lambda p, i: (p, 0, 0))

    out_h, out_w = pl.pallas_call(
        kernel,
        out_shape=(jax.ShapeDtypeStruct((p_shards, 1, hw), jnp.float32),
                   jax.ShapeDtypeStruct((p_shards, 1, hw), jnp.float32)),
        grid_spec=pltpu.PrefetchScalarGridSpec(
            num_scalar_prefetch=0,
            grid=(p_shards, cps),
            in_specs=[x_spec, ids_spec],
            out_specs=[out_spec, out_spec],
        ),
        compiler_params=pltpu.CompilerParams(
            dimension_semantics=("parallel", "arbitrary")),
        cost_estimate=pl.CostEstimate(
            flops=6 * n * hw,
            transcendentals=0,
            bytes_accessed=n * hw * itemsize + 2 * hw * 4 + 2 * p_shards * hw * 4),
    )(xr, ids)

    # Static dedup factors for the two wrap-ambiguous degenerate shapes
    # (H == 2 counts each vertical pair twice; H == 1, W == 2 ditto for the
    # single horizontal pair).  No-op for ordinary inputs.
    h_factor = 0.5 if h == 2 else 1.0
    w_factor = 0.5 if (h == 1 and w == 2) else 1.0
    h_tv = jnp.sum(out_h) * h_factor
    w_tv = jnp.sum(out_w) * w_factor

    # Normalisation mirrors the PyTorch module exactly (count_h unguarded:
    # H == 1 gives inf/nan, just like the reference implementation).
    count_h = c * (h - 1) * w
    count_w = max(c * h * (w - 1), 1)
    return tv_loss_weight * 2.0 * (h_tv / count_h + w_tv / count_w) / b


def _tv_loss_ref(x, tv_loss_weight=1.0):
    """Pure-JAX reference (mirrors the PyTorch module exactly)."""
    b, c, h, w = x.shape
    count_h = c * (h - 1) * w
    count_w = max(c * h * (w - 1), 1)
    h_tv = jnp.sum((x[:, :, 1:, :] - x[:, :, : h - 1, :]) ** 2)
    w_tv = jnp.sum((x[:, :, :, 1:] - x[:, :, :, : w - 1]) ** 2)
    return tv_loss_weight * 2.0 * (h_tv / count_h + w_tv / count_w) / b


if __name__ == "__main__":
    # 1) Main shape implied by the module (NCHW feature planes).
    x = jax.random.normal(jax.random.PRNGKey(0), (2, 4, 16, 16), jnp.float32)
    out = jax.block_until_ready(tv_loss(x, 1.0))
    ref = _tv_loss_ref(x, 1.0)
    assert jnp.allclose(out, ref, rtol=1e-4, atol=1e-5), (out, ref)

    # 2) Multi-chunk grid, partial (masked) tail block, both megacore shards.
    x2 = jax.random.normal(jax.random.PRNGKey(1), (1, 12, 16, 16), jnp.float32)
    out2 = jax.block_until_ready(tv_loss(x2, 0.5, target_block_bytes=8 * 1024))
    ref2 = _tv_loss_ref(x2, 0.5)
    assert jnp.allclose(out2, ref2, rtol=1e-4, atol=1e-5), (out2, ref2)

    # 3) Odd chunk count: shard 1 gets a clamped, fully-masked phantom step.
    x3 = jax.random.normal(jax.random.PRNGKey(2), (1, 17, 16, 16), jnp.float32)
    out3 = jax.block_until_ready(tv_loss(x3, 1.0, target_block_bytes=8 * 1024))
    ref3 = _tv_loss_ref(x3, 1.0)
    assert jnp.allclose(out3, ref3, rtol=1e-4, atol=1e-5), (out3, ref3)

    # 4) Multi-iteration inner compute loop (block larger than sub-chunk).
    x4 = jax.random.normal(jax.random.PRNGKey(3), (2, 8, 16, 16), jnp.float32)
    out4 = jax.block_until_ready(tv_loss(x4, 1.0, compute_rows=8))
    ref4 = _tv_loss_ref(x4, 1.0)
    assert jnp.allclose(out4, ref4, rtol=1e-4, atol=1e-5), (out4, ref4)

    # 5) Tiny slab count (fewer rows than one sublane group).
    x5 = jax.random.normal(jax.random.PRNGKey(4), (1, 3, 16, 16), jnp.float32)
    out5 = jax.block_until_ready(tv_loss(x5, 2.0))
    ref5 = _tv_loss_ref(x5, 2.0)
    assert jnp.allclose(out5, ref5, rtol=1e-4, atol=1e-5), (out5, ref5)

    print("KERNEL_OK")
</pallas_src>

<mosaic_0001>
module attributes {stable_mosaic.version = 11 : i64} {
  func.func @kernel(%arg0: i32, %arg1: i32, %arg2: memref<8x256xf32, #tpu.memory_space<vmem>>, %arg3: memref<2x256xi32, #tpu.memory_space<vmem>>, %arg4: memref<1x1x256xf32, #tpu.memory_space<vmem>>, %arg5: memref<1x1x256xf32, #tpu.memory_space<vmem>>) attributes {dimension_semantics = [#tpu.dimension_semantics<parallel>, #tpu.dimension_semantics<arbitrary>], iteration_bounds = array<i64: 1, 1>, scalar_prefetch = 0 : i64, scratch_operands = 0 : i64, tpu.core_type = #tpu.core_type<tc>, window_params = [{transform_indices = @transform_0, window_bounds = array<i64: 8, 256>}, {pipeline_mode = #tpu.pipeline_mode<synchronous>, transform_indices = @transform_1, window_bounds = array<i64: 2, 256>}, {transform_indices = @transform_2, window_bounds = array<i64: 1, 1, 256>}, {transform_indices = @transform_3, window_bounds = array<i64: 1, 1, 256>}]} {
    %c0_i32 = arith.constant 0 : i32
    %0 = arith.cmpi eq, %arg1, %c0_i32 : i32
    %1 = arith.extui %0 : i1 to i32
    %c0_i32_0 = arith.constant 0 : i32
    %2 = arith.cmpi ne, %1, %c0_i32_0 : i32
    scf.if %2 {
      %cst_29 = arith.constant 0.000000e+00 : f32
      %65 = vector.broadcast %cst_29 : f32 to vector<1x1x256xf32>
      %c0_30 = arith.constant 0 : index
      %c0_31 = arith.constant 0 : index
      %c0_32 = arith.constant 0 : index
      %66 = vector.load %arg4[%c0_30, %c0_31, %c0_32] : memref<1x1x256xf32, #tpu.memory_space<vmem>>, vector<1x1x256xf32>
      tpu.vector_store %arg4[%c0_30, %c0_31, %c0_32], %65 {strides = array<i32>} : memref<1x1x256xf32, #tpu.memory_space<vmem>>, vector<1x1x256xf32>,
      %cst_33 = arith.constant 0.000000e+00 : f32
      %67 = vector.broadcast %cst_33 : f32 to vector<1x1x256xf32>
      %c0_34 = arith.constant 0 : index
      %c0_35 = arith.constant 0 : index
      %c0_36 = arith.constant 0 : index
      %68 = vector.load %arg5[%c0_34, %c0_35, %c0_36] : memref<1x1x256xf32, #tpu.memory_space<vmem>>, vector<1x1x256xf32>
      tpu.vector_store %arg5[%c0_34, %c0_35, %c0_36], %67 {strides = array<i32>} : memref<1x1x256xf32, #tpu.memory_space<vmem>>, vector<1x1x256xf32>,
    } else {
    }
    %c1_i32 = arith.constant 1 : i32
    %3 = arith.muli %arg0, %c1_i32 : i32
    %4 = arith.addi %3, %arg1 : i32
    %c8_i32 = arith.constant 8 : i32
    %5 = arith.muli %4, %c8_i32 : i32
    %c0 = arith.constant 0 : index
    %c0_1 = arith.constant 0 : index
    %6 = vector.load %arg3[%c0, %c0_1] : memref<2x256xi32, #tpu.memory_space<vmem>>, vector<1x256xi32>
    %c1 = arith.constant 1 : index
    %c0_2 = arith.constant 0 : index
    %7 = vector.load %arg3[%c1, %c0_2] : memref<2x256xi32, #tpu.memory_space<vmem>>, vector<1x256xi32>
    %c255_i32 = arith.constant 255 : i32
    %8 = tpu.dynamic_rotate %6 by %c255_i32 dim 1 : vector<1x256xi32>, i32 -> vector<1x256xi32>
    %c255_i32_3 = arith.constant 255 : i32
    %9 = tpu.dynamic_rotate %7 by %c255_i32_3 dim 1 : vector<1x256xi32>, i32 -> vector<1x256xi32>
    %c240_i32 = arith.constant 240 : i32
    %10 = tpu.dynamic_rotate %6 by %c240_i32 dim 1 : vector<1x256xi32>, i32 -> vector<1x256xi32>
    %11 = arith.subi %8, %6 : vector<1x256xi32>
    %12 = math.absi %11 : vector<1x256xi32>
    %c1_i32_4 = arith.constant 1 : i32
    %13 = vector.broadcast %c1_i32_4 : i32 to vector<1x256xi32>
    %14 = arith.cmpi eq, %12, %13 : vector<1x256xi32>
    %15 = arith.cmpi eq, %9, %7 : vector<1x256xi32>
    %16 = arith.andi %14, %15 : vector<1x256xi1>
    %17 = arith.subi %10, %6 : vector<1x256xi32>
    %18 = math.absi %17 : vector<1x256xi32>
    %c16_i32 = arith.constant 16 : i32
    %19 = vector.broadcast %c16_i32 : i32 to vector<1x256xi32>
    %20 = arith.cmpi eq, %18, %19 : vector<1x256xi32>
    %21 = tpu.iota {dimensions = array<i32: 0>} : vector<8x256xi32>
    %cst = arith.constant 0.000000e+00 : f32
    %22 = vector.broadcast %cst : f32 to vector<1x256xf32>
    %c0_i32_5 = arith.constant 0 : i32
    %c8_i32_6 = arith.constant 8 : i32
    %23 = arith.muli %c0_i32_5, %c8_i32_6 : i32
    %24 = tpu.assume_multiple %23, 8 : i32
    %25 = arith.index_cast %24 : i32 to index
    %c0_7 = arith.constant 0 : index
    %26 = vector.load %arg2[%25, %c0_7] : memref<8x256xf32, #tpu.memory_space<vmem>>, vector<8x256xf32>
    %c255_i32_8 = arith.constant 255 : i32
    %27 = tpu.dynamic_rotate %26 by %c255_i32_8 dim 1 : vector<8x256xf32>, i32 -> vector<8x256xf32>
    %c240_i32_9 = arith.constant 240 : i32
    %28 = tpu.dynamic_rotate %26 by %c240_i32_9 dim 1 : vector<8x256xf32>, i32 -> vector<8x256xf32>
    %c8_i32_10 = arith.constant 8 : i32
    %29 = arith.muli %c0_i32_5, %c8_i32_10 : i32
    %30 = arith.addi %5, %29 : i32
    %31 = vector.broadcast %30 : i32 to vector<8x256xi32>
    %32 = arith.addi %31, %21 : vector<8x256xi32>
    %c8_i32_11 = arith.constant 8 : i32
    %33 = vector.broadcast %c8_i32_11 : i32 to vector<8x256xi32>
    %34 = arith.cmpi slt, %32, %33 : vector<8x256xi32>
    %35 = vector.broadcast %16 : vector<1x256xi1> to vector<8x256xi1>
    %36 = arith.andi %34, %35 : vector<8x256xi1>
    %37 = arith.subf %27, %26 : vector<8x256xf32>
    %cst_12 = arith.constant 0.000000e+00 : f32
    %38 = vector.broadcast %cst_12 : f32 to vector<8x256xf32>
    %39 = arith.select %36, %37, %38 : vector<8x256xi1>, vector<8x256xf32>
    %40 = vector.broadcast %20 : vector<1x256xi1> to vector<8x256xi1>
    %41 = arith.andi %34, %40 : vector<8x256xi1>
    %42 = arith.subf %28, %26 : vector<8x256xf32>
    %cst_13 = arith.constant 0.000000e+00 : f32
    %43 = vector.broadcast %cst_13 : f32 to vector<8x256xf32>
    %44 = arith.select %41, %42, %43 : vector<8x256xi1>, vector<8x256xf32>
    %45 = arith.mulf %39, %39 : vector<8x256xf32>
    %cst_14 = arith.constant dense<0.000000e+00> : vector<256xf32>
    %46 = vector.multi_reduction <add>, %45, %cst_14 [0] : vector<8x256xf32> to vector<256xf32>
    %47 = vector.shape_cast %46 : vector<256xf32> to vector<1x256xf32>
    %48 = arith.addf %22, %47 : vector<1x256xf32>
    %49 = arith.mulf %44, %44 : vector<8x256xf32>
    %cst_15 = arith.constant dense<0.000000e+00> : vector<256xf32>
    %50 = vector.multi_reduction <add>, %49, %cst_15 [0] : vector<8x256xf32> to vector<256xf32>
    %51 = vector.shape_cast %50 : vector<256xf32> to vector<1x256xf32>
    %52 = arith.addf %22, %51 : vector<1x256xf32>
    %c1_i32_16 = arith.constant 1 : i32
    %c0_17 = arith.constant 0 : index
    %c0_18 = arith.constant 0 : index
    %c0_19 = arith.constant 0 : index
    %53 = vector.load %arg4[%c0_17, %c0_18, %c0_19] : memref<1x1x256xf32, #tpu.memory_space<vmem>>, vector<1x1x256xf32>
    %54 = vector.shape_cast %53 : vector<1x1x256xf32> to vector<1x256xf32>
    %55 = arith.addf %54, %52 : vector<1x256xf32>
    %c0_20 = arith.constant 0 : index
    %c0_21 = arith.constant 0 : index
    %c0_22 = arith.constant 0 : index
    %56 = vector.load %arg4[%c0_20, %c0_21, %c0_22] : memref<1x1x256xf32, #tpu.memory_space<vmem>>, vector<1x1x256xf32>
    %57 = vector.shape_cast %56 : vector<1x1x256xf32> to vector<1x256xf32>
    %58 = vector.shape_cast %55 : vector<1x256xf32> to vector<1x1x256xf32>
    tpu.vector_store %arg4[%c0_20, %c0_21, %c0_22], %58 {strides = array<i32>} : memref<1x1x256xf32, #tpu.memory_space<vmem>>, vector<1x1x256xf32>,
    %c0_23 = arith.constant 0 : index
    %c0_24 = arith.constant 0 : index
    %c0_25 = arith.constant 0 : index
    %59 = vector.load %arg5[%c0_23, %c0_24, %c0_25] : memref<1x1x256xf32, #tpu.memory_space<vmem>>, vector<1x1x256xf32>
    %60 = vector.shape_cast %59 : vector<1x1x256xf32> to vector<1x256xf32>
    %61 = arith.addf %60, %48 : vector<1x256xf32>
    %c0_26 = arith.constant 0 : index
    %c0_27 = arith.constant 0 : index
    %c0_28 = arith.constant 0 : index
    %62 = vector.load %arg5[%c0_26, %c0_27, %c0_28] : memref<1x1x256xf32, #tpu.memory_space<vmem>>, vector<1x1x256xf32>
    %63 = vector.shape_cast %62 : vector<1x1x256xf32> to vector<1x256xf32>
    %64 = vector.shape_cast %61 : vector<1x256xf32> to vector<1x1x256xf32>
    tpu.vector_store %arg5[%c0_26, %c0_27, %c0_28], %64 {strides = array<i32>} : memref<1x1x256xf32, #tpu.memory_space<vmem>>, vector<1x1x256xf32>,
    return
  }
  func.func @transform_0(%arg0: i32, %arg1: i32) -> (i32, i32) {
    %c1_i32 = arith.constant 1 : i32
    %0 = arith.muli %arg0, %c1_i32 : i32
    %1 = arith.addi %0, %arg1 : i32
    %c0_i32 = arith.constant 0 : i32
    %2 = arith.minsi %1, %c0_i32 : i32
    %c0_i32_0 = arith.constant 0 : i32
    %c0_i32_1 = arith.constant 0 : i32
    return %2, %c0_i32_0 : i32, i32
  }
  func.func @transform_1(%arg0: i32, %arg1: i32) -> (i32, i32) {
    %c0_i32 = arith.constant 0 : i32
    %c0_i32_0 = arith.constant 0 : i32
    %c0_i32_1 = arith.constant 0 : i32
    return %c0_i32, %c0_i32_0 : i32, i32
  }
  func.func @transform_2(%arg0: i32, %arg1: i32) -> (i32, i32, i32) {
    %c0_i32 = arith.constant 0 : i32
    %c0_i32_0 = arith.constant 0 : i32
    %c0_i32_1 = arith.constant 0 : i32
    return %arg0, %c0_i32, %c0_i32_0 : i32, i32, i32
  }
  func.func @transform_3(%arg0: i32, %arg1: i32) -> (i32, i32, i32) {
    %c0_i32 = arith.constant 0 : i32
    %c0_i32_0 = arith.constant 0 : i32
    %c0_i32_1 = arith.constant 0 : i32
    return %arg0, %c0_i32, %c0_i32_0 : i32, i32, i32
  }
}

</mosaic_0001>

<llo_original>
// kernel: tpu_custom_call.1
$region0: #{tpu_custom_call.1}
  #allocation0 [shape = 'u32[]', space=smem, size = 0x4, offset = 0x4, fixed_abs, tag = 'smem constant byte address 0x4 - core index']
  #allocation1 [shape = 'u32[144,128]{1,0:T(1,128)}', space=vmem, size = 0x12000, scoped, tag = 'internal scratch']
  %s0 = inlined_call_operand.hbm [shape: f32[8,256], index: 0, kind: input, shape index: {}]
  %s1 = inlined_call_operand.hbm [shape: s32[2,256], index: 1, kind: input, shape index: {}]
  %s2 = inlined_call_operand.hbm [shape: f32[1,1,256], index: 2, kind: output, shape index: {0}]
  %s3 = inlined_call_operand.hbm [shape: f32[1,1,256], index: 3, kind: output, shape index: {1}]
  %4 = xla_tuple %s2, %s3
  %s5 = sld [smem:[#allocation0]]
  $region38: #{tpu_custom_call.1} parent=0
    _
  %s7 = ssub.s32 1, %s5
  %s8 = scalar_select 0, %s7, %s5
  $region1: #{tpu_custom_call.1} parent=0
    #allocation2 [shape = 'u8[8192]{0}', space=vmem, size = 0x2000, scoped, tag = 'input window, operand 0, single buffered']
    #allocation3 [shape = 's32[1]{0}', space=sflag, size = 0x4, scoped, tag = 'scoped memory for tpu_custom_call.1']
    #allocation4 [shape = 's32[1]{0}', space=sflag, size = 0x4, scoped, tag = 'scoped memory for tpu_custom_call.1']
    #allocation5 [shape = 'u8[2048]{0}', space=vmem, size = 0x800, scoped, tag = 'input window, operand 1, single buffered']
    #allocation6 [shape = 's32[1]{0}', space=sflag, size = 0x4, scoped, tag = 'scoped memory for tpu_custom_call.1']
    #allocation7 [shape = 'u8[1024]{0}', space=vmem, size = 0x400, scoped, tag = 'output window, operand 0, single buffered']
    #allocation8 [shape = 'u8[1024]{0}', space=vmem, size = 0x400, scoped, tag = 'output window, operand 1, single buffered']
    #allocation9 [shape = 's32[1]{0}', space=sflag, size = 0x4, scoped, tag = 'scoped memory for tpu_custom_call.1']
    %9 = vsyncpa [#allocation3], 0
    %10 = vsyncpa [#allocation6], 0
    %11 = vsyncpa [#allocation4], 0
    %12 = vsyncpa [#allocation9], 0
    // Predicated region
    $region2: #{tpu_custom_call.1} parent=1 // pred_check
      _
    $region3: #{tpu_custom_call.1} parent=1 // pred_check_branch
      %14 = sbr.rel (0) target = $region5
    $region4: #{tpu_custom_call.1} parent=1 // pred_region
      %s15 = sadd.s32 0, 0
      %p16 = scmp.lt.s32.totalorder %s15, 0
      %s17 = scalar_select %p16, %s15, 0
      %s19 = ssub.s32 256, 256
      %20 = vsyncadd [#allocation3], %s19
      %s21 = smul.addr %s17, 2
      %s22 = smul.addr %s21, 128
      %s23 = scalar_lea.hbm %s0, %s22
      %s25 = sshll.u32 [#allocation2], 4
      %s26 = int_to_ptr.vmem [resolvable:$true] %s25
      %28 = dma.hbm_to_vmem [thread:$0]  %s23, 256, %s26, [#allocation3]
    $region5: #{tpu_custom_call.1} parent=1 // pred_fallthru
      _
    // Predicated region
    $region6: #{tpu_custom_call.1} parent=1 // pred_check
      _
    $region7: #{tpu_custom_call.1} parent=1 // pred_check_branch
      %30 = sbr.rel (0) target = $region9
    $region8: #{tpu_custom_call.1} parent=1 // pred_region
      %s32 = ssub.s32 64, 64
      %33 = vsyncadd [#allocation6], %s32
      %s35 = sshll.u32 [#allocation5], 4
      %s36 = int_to_ptr.vmem [resolvable:$true] %s35
      %38 = dma.hbm_to_vmem [thread:$0]  %s1, 64, %s36, [#allocation6]
    $region9: #{tpu_custom_call.1} parent=1 // pred_fallthru
      _
    // Predicated region
    $region10: #{tpu_custom_call.1} parent=1 // pred_check
      _
    $region11: #{tpu_custom_call.1} parent=1 // pred_check_branch
      %40 = sbr.rel (0) target = $region13
    $region12: #{tpu_custom_call.1} parent=1 // pred_region
      %41 = dma.done [#allocation3], 256
    $region13: #{tpu_custom_call.1} parent=1 // pred_fallthru
      _
    // Predicated region
    $region14: #{tpu_custom_call.1} parent=1 // pred_check
      _
    $region15: #{tpu_custom_call.1} parent=1 // pred_check_branch
      %43 = sbr.rel (0) target = $region17
    $region16: #{tpu_custom_call.1} parent=1 // pred_region
      %44 = dma.done [#allocation6], 64
    $region17: #{tpu_custom_call.1} parent=1 // pred_fallthru
      _
    %s45 = sadd.s32 0, 0
    %p46 = scmp.lt.s32.totalorder %s45, 0
    %s47 = scalar_select %p46, %s45, 0
    %p48 = scmp.eq.s32.totalorder 0, 0
    // Predicated region
    $region18: #{tpu_custom_call.1} parent=1 // pred_check
      %p49 = pneg %p48
    $region19: #{tpu_custom_call.1} parent=1 // pred_check_branch
      %51 = sbr.rel (%p49) target = $region21
    $region20: #{tpu_custom_call.1} parent=1 // pred_region
      %v52 = vlaneseq
      %vm53 = vcmp.ge.s32.totalorder %v52, 0
      %vm54 = vcmp.lt.s32.totalorder %v52, 256
      %vm55 = vmand %vm53, %vm54
      %56 = vst.msk [vmem:[#allocation7] sm:$0x3] %vm55, 0.0
      %57 = vst.msk [vmem:[#allocation8] sm:$0x3] %vm55, 0.0
    $region21: #{tpu_custom_call.1} parent=1 // pred_fallthru
      _
    %s58 = sadd.s32 0, 0
    %s59 = smul.u32 %s58, 8
    %v60 = vld [vmem:[#allocation5] ss:$2 sm:$0x3]
    %s61 = scalar_lea.vmem [#allocation5], 1
    %v62 = vld [vmem:[%s61] ss:$2 sm:$0x3]
    %v63 = vlaneseq
    %v64 = vshrl.u32 %v63, 7
    %v65 = vsub.s32 0, %v64
    %v66 = vrot.slane %v60, %v65
    %v67 = vlaneseq
    %v68 = vshrl.u32 %v67, 7
    %v69 = vsub.s32 1, %v68
    %v70 = vrot.slane %v60, %v69
    %71 = vrot.lane.b32.xlu0 %v66, 127
    %v72 = vpop.permute.xlu0 %71
    %73 = vrot.lane.b32.xlu0 %v70, 127
    %v74 = vpop.permute.xlu0 %73
    %v75 = vlaneseq
    %v76 = vand.u32 %v75, 127
    %vm77 = vcmp.lt.s32.totalorder %v76, 127
    %v78 = vsel %vm77, %v72, %v74
    %v79 = vsel %vm77, %v74, %v72
    %v80 = vlaneseq
    %v81 = vshrl.u32 %v80, 7
    %v82 = vsub.s32 0, %v81
    %v83 = vrot.slane %v62, %v82
    %v84 = vlaneseq
    %v85 = vshrl.u32 %v84, 7
    %v86 = vsub.s32 1, %v85
    %v87 = vrot.slane %v62, %v86
    %88 = vrot.lane.b32.xlu0 %v83, 127
    %v89 = vpop.permute.xlu0 %88
    %90 = vrot.lane.b32.xlu0 %v87, 127
    %v91 = vpop.permute.xlu0 %90
    %v92 = vsel %vm77, %v89, %v91
    %v93 = vsel %vm77, %v91, %v89
    %94 = vrot.lane.b32.xlu0 %v66, 112
    %v95 = vpop.permute.xlu0 %94
    %96 = vrot.lane.b32.xlu0 %v70, 112
    %v97 = vpop.permute.xlu0 %96
    %vm98 = vcmp.lt.s32.totalorder %v76, 112
    %v99 = vsel %vm98, %v95, %v97
    %v100 = vsel %vm98, %v97, %v95
    %v101 = vsub.s32 %v78, %v66
    %v102 = vsub.s32 %v79, %v70
    %vm103 = vcmp.lt.s32.totalorder %v101, 0
    %v104 = vsub.s32 0, %v101
    %v105 = vsel %vm103, %v104, %v101
    %vm106 = vcmp.lt.s32.totalorder %v102, 0
    %v107 = vsub.s32 0, %v102
    %v108 = vsel %vm106, %v107, %v102
    %vm109 = vcmp.eq.s32.totalorder %v105, 1
    %vm110 = vcmp.eq.s32.totalorder %v108, 1
    %vm111 = vcmp.eq.s32.totalorder %v92, %v83
    %vm112 = vcmp.eq.s32.totalorder %v93, %v87
    %vm113 = vmand %vm109, %vm111
    %vm114 = vmand %vm110, %vm112
    %v115 = vsub.s32 %v99, %v66
    %v116 = vsub.s32 %v100, %v70
    %vm117 = vcmp.lt.s32.totalorder %v115, 0
    %v118 = vsub.s32 0, %v115
    %v119 = vsel %vm117, %v118, %v115
    %vm120 = vcmp.lt.s32.totalorder %v116, 0
    %v121 = vsub.s32 0, %v116
    %v122 = vsel %vm120, %v121, %v116
    %vm123 = vcmp.eq.s32.totalorder %v119, 16
    %vm124 = vcmp.eq.s32.totalorder %v122, 16
    %v125 = vlaneseq
    %v126 = vshrl.u32 %v125, 7
    %s127 = smul.u32 0, 2
    %s128 = smul.addr %s127, 8
    %s129 = scalar_lea.vmem [#allocation2], %s128
    %v130 = vld [vmem:[%s129] sm:$0xff]
    %v131 = vld [vmem:[%s129 + $0x8] sm:$0xff]
    %132 = vrot.lane.b32.xlu0 %v130, 127
    %v133 = vpop.permute.xlu0 %132
    %134 = vrot.lane.b32.xlu0 %v131, 127
    %v135 = vpop.permute.xlu0 %134
    %v136 = vsel %vm77, %v133, %v135
    %v137 = vsel %vm77, %v135, %v133
    %138 = vrot.lane.b32.xlu0 %v130, 112
    %v139 = vpop.permute.xlu0 %138
    %140 = vrot.lane.b32.xlu0 %v131, 112
    %v141 = vpop.permute.xlu0 %140
    %v142 = vsel %vm98, %v139, %v141
    %v143 = vsel %vm98, %v141, %v139
    %v144 = vstv %s59
    %v145 = vadd.s32 %v144, %v126
    %vm146 = vcmp.lt.s32.totalorder %v145, 8
    %v147 = vsel %vm113, 1, 0
    %v148 = vsel %vm114, 1, 0
    %v149 = vlaneseq
    %v150 = vshrl.u32 %v149, 7
    %v151 = vsub.s32 0, %v150
    %v152 = vrot.slane %v147, %v151
    %v153 = vlaneseq
    %v154 = vshrl.u32 %v153, 7
    %v155 = vsub.s32 0, %v154
    %v156 = vrot.slane %v148, %v155
    %vm157 = vcmp.eq.s32.totalorder %v152, 1
    %vm158 = vcmp.eq.s32.totalorder %v156, 1
    %vm159 = vmand %vm146, %vm157
    %vm160 = vmand %vm146, %vm158
    %v161 = vsub.f32 %v136, %v130
    %v162 = vsub.f32 %v137, %v131
    %v163 = vsel %vm159, %v161, 0.0
    %v164 = vsel %vm160, %v162, 0.0
    %v165 = vsel %vm123, 1, 0
    %v166 = vsel %vm124, 1, 0
    %v167 = vlaneseq
    %v168 = vshrl.u32 %v167, 7
    %v169 = vsub.s32 0, %v168
    %v170 = vrot.slane %v165, %v169
    %v171 = vlaneseq
    %v172 = vshrl.u32 %v171, 7
    %v173 = vsub.s32 0, %v172
    %v174 = vrot.slane %v166, %v173
    %vm175 = vcmp.eq.s32.totalorder %v170, 1
    %vm176 = vcmp.eq.s32.totalorder %v174, 1
    %vm177 = vmand %vm146, %vm175
    %vm178 = vmand %vm146, %vm176
    %v179 = vsub.f32 %v142, %v130
    %v180 = vsub.f32 %v143, %v131
    %v181 = vsel %vm177, %v179, 0.0
    %v182 = vsel %vm178, %v180, 0.0
    %v183 = vmul.f32 %v163, %v163
    %v184 = vmul.f32 %v164, %v164
    %v185 = vrot.slane %v183, 4
    %v186 = vadd.f32 %v183, %v185
    %v187 = vrot.slane %v186, 2
    %v188 = vadd.f32 %v186, %v187
    %v189 = vrot.slane %v188, 1
    %v190 = vadd.f32 %v188, %v189
    %v191 = vrot.slane %v184, 4
    %v192 = vadd.f32 %v184, %v191
    %v193 = vrot.slane %v192, 2
    %v194 = vadd.f32 %v192, %v193
    %v195 = vrot.slane %v194, 1
    %v196 = vadd.f32 %v194, %v195
    %v197 = vadd.f32 %v190, 0.0
    %v198 = vadd.f32 %v196, 0.0
    %v199 = vmul.f32 %v181, %v181
    %v200 = vmul.f32 %v182, %v182
    %v201 = vrot.slane %v199, 4
    %v202 = vadd.f32 %v199, %v201
    %v203 = vrot.slane %v202, 2
    %v204 = vadd.f32 %v202, %v203
    %v205 = vrot.slane %v204, 1
    %v206 = vadd.f32 %v204, %v205
    %v207 = vrot.slane %v200, 4
    %v208 = vadd.f32 %v200, %v207
    %v209 = vrot.slane %v208, 2
    %v210 = vadd.f32 %v208, %v209
    %v211 = vrot.slane %v210, 1
    %v212 = vadd.f32 %v210, %v211
    %v213 = vadd.f32 %v206, 0.0
    %v214 = vadd.f32 %v212, 0.0
    %v215 = vld [vmem:[#allocation7] sm:$0x3]
    %v218 = vcombine.low %v213, %v214
    %v220 = vunpack.c.l.s4 1966171168
    %v221 = vunpack.c.0.s8 %v220
    %v222 = vlaneseq
    %v223 = vshrl.u32 %v222, 7
    %v224 = vsub.s32 %v221, %v223
    %v225 = vrot.slane %v218, %v224
    %v227 = vunpack.c.l.s4 1966171168
    %v228 = vunpack.c.0.s8 %v227
    %v229 = vlaneseq
    %v230 = vshrl.u32 %v229, 7
    %v231 = vsub.s32 %v228, %v230
    %v232 = vrot.slane %v225, %v231
    %v234 = vadd.f32 %v215, %v232
    %v235 = vlaneseq
    %vm236 = vcmp.ge.s32.totalorder %v235, 0
    %vm237 = vcmp.lt.s32.totalorder %v235, 256
    %vm238 = vmand %vm236, %vm237
    %239 = vst.msk [vmem:[#allocation7] sm:$0x3] %vm238, %v234
    %v240 = vld [vmem:[#allocation8] sm:$0x3]
    %v243 = vcombine.low %v197, %v198
    %v245 = vunpack.c.l.s4 1966171168
    %v246 = vunpack.c.0.s8 %v245
    %v247 = vlaneseq
    %v248 = vshrl.u32 %v247, 7
    %v249 = vsub.s32 %v246, %v248
    %v250 = vrot.slane %v243, %v249
    %v252 = vunpack.c.l.s4 1966171168
    %v253 = vunpack.c.0.s8 %v252
    %v254 = vlaneseq
    %v255 = vshrl.u32 %v254, 7
    %v256 = vsub.s32 %v253, %v255
    %v257 = vrot.slane %v250, %v256
    %v259 = vadd.f32 %v240, %v257
    %260 = vst.msk [vmem:[#allocation8] sm:$0x3] %vm238, %v259
    // Predicated region
    $region22: #{tpu_custom_call.1} parent=1 // pred_check
      _
    $region23: #{tpu_custom_call.1} parent=1 // pred_check_branch
      %262 = sbr.rel (0) target = $region25
    $region24: #{tpu_custom_call.1} parent=1 // pred_region
      %s264 = ssub.s32 32, 32
      %265 = vsyncadd [#allocation4], %s264
      %s267 = sshll.u32 [#allocation7], 4
      %s268 = int_to_ptr.vmem [resolvable:$true] %s267
      %270 = dma.vmem_to_hbm [thread:$0]  %s268, 32, %s2, [#allocation4]
    $region25: #{tpu_custom_call.1} parent=1 // pred_fallthru
      _
    // Predicated region
    $region26: #{tpu_custom_call.1} parent=1 // pred_check
      _
    $region27: #{tpu_custom_call.1} parent=1 // pred_check_branch
      %272 = sbr.rel (0) target = $region29
    $region28: #{tpu_custom_call.1} parent=1 // pred_region
      %s274 = ssub.s32 32, 32
      %275 = vsyncadd [#allocation9], %s274
      %s277 = sshll.u32 [#allocation8], 4
      %s278 = int_to_ptr.vmem [resolvable:$true] %s277
      %280 = dma.vmem_to_hbm [thread:$0]  %s278, 32, %s3, [#allocation9]
    $region29: #{tpu_custom_call.1} parent=1 // pred_fallthru
      _
    // Predicated region
    $region30: #{tpu_custom_call.1} parent=1 // pred_check
      _
    $region31: #{tpu_custom_call.1} parent=1 // pred_check_branch
      %282 = sbr.rel (0) target = $region33
    $region32: #{tpu_custom_call.1} parent=1 // pred_region
      %283 = dma.done [#allocation4], 32
    $region33: #{tpu_custom_call.1} parent=1 // pred_fallthru
      _
    // Predicated region
    $region34: #{tpu_custom_call.1} parent=1 // pred_check
      _
    $region35: #{tpu_custom_call.1} parent=1 // pred_check_branch
      %285 = sbr.rel (0) target = $region37
    $region36: #{tpu_custom_call.1} parent=1 // pred_region
      %286 = dma.done [#allocation9], 32
    $region37: #{tpu_custom_call.1} parent=1 // pred_fallthru
      _
    %287 = vsyncpa [#allocation3], 1
    %288 = vsyncpa [#allocation6], 1
    %289 = vsyncpa [#allocation4], 1
    %290 = vsyncpa [#allocation9], 1

</llo_original>
